<compile_context>
chip_gen: v7x
topology: tpu7x:2x2x1
jax: 0.10.0
libtpu: 0.0.40
codegen_flags: <defaults>
</compile_context>

<pallas_src>
import functools

import jax
import jax.numpy as jnp
from jax.experimental import pallas as pl
from jax.experimental.pallas import tpu as pltpu


def _round_up(x, m):
    return ((x + m - 1) // m) * m


def _mlp3(x, w1, b1, w2, b2, w3, b3, final_act):
    """Three chained Linear layers (weights already (in, out)), ReLU between them."""
    h = jnp.maximum(jnp.dot(x, w1, preferred_element_type=jnp.float32) + b1, 0.0)
    h = jnp.maximum(jnp.dot(h, w2, preferred_element_type=jnp.float32) + b2, 0.0)
    h = jnp.dot(h, w3, preferred_element_type=jnp.float32) + b3
    return final_act(h)


def _usad_kernel(a_scale, b_scale,
                 x_ref,
                 ew1, eb1, ew2, eb2, ew3, eb3,      # encoder
                 dw1, db1, dw2, db2, dw3, db3,      # decoder1
                 gw1, gb1, gw2, gb2, gw3, gb3,      # decoder2
                 z_ref, score_ref):
    x = x_ref[...].astype(jnp.float32)

    # encoder: Linear->ReLU x3 (final activation is also ReLU)
    z = _mlp3(x, ew1[...], eb1[...], ew2[...], eb2[...], ew3[...], eb3[...],
              lambda h: jnp.maximum(h, 0.0))
    # decoders: Linear->ReLU x2, Linear->Sigmoid (sigmoid -> EUP, off the VALU path)
    w1 = _mlp3(z, dw1[...], db1[...], dw2[...], db2[...], dw3[...], db3[...],
               jax.nn.sigmoid)
    w2 = _mlp3(z, gw1[...], gb1[...], gw2[...], gb2[...], gw3[...], gb3[...],
               jax.nn.sigmoid)

    z_ref[...] = z.astype(z_ref.dtype)

    # per-row reconstruction errors; cross-lane sum goes to the XLU (cheap),
    # alpha/w_size and beta/w_size are pre-folded scalar constants.
    d1 = x - w1
    d2 = x - w2
    s1 = jnp.sum(d1 * d1, axis=1, keepdims=True)
    s2 = jnp.sum(d2 * d2, axis=1, keepdims=True)
    score_ref[...] = (a_scale * s1 + b_scale * s2).astype(score_ref.dtype)


def _choose_block(batch, block_b):
    """Large, sublane-aligned batch tile; keep >= 2 grid steps (MXU-friendly
    multiple-of-256 tiles) once the batch is big enough for dual-core sharding."""
    bb = min(int(block_b), _round_up(batch, 8))
    if batch >= 512:
        bb = min(bb, _round_up(pl.cdiv(batch, 2), 256))
    bb = max(8, (bb // 8) * 8)
    return bb


@functools.partial(jax.jit, static_argnames=("alpha", "beta", "block_b"))
def usad_forward(x, params, *, alpha=0.5, beta=0.5, block_b=1024):
    """Fused UsadModel.forward.

    x: (B, w_size) float array.
    params: flat tuple of 18 arrays in the order
        (enc w1,b1,w2,b2,w3,b3, dec1 w1..b3, dec2 w1..b3),
    with weights pre-transposed to (in, out) and biases shaped (1, out).
    Returns (z, score, None), matching the PyTorch module.
    """
    B, w_size = x.shape
    z_size = params[4].shape[1]

    bb = _choose_block(B, block_b)
    Bp = _round_up(B, bb)
    if Bp != B:
        # zero-pad the ragged tail; padded rows are computed then discarded
        x = jnp.pad(x, ((0, Bp - B), (0, 0)))

    grid = (Bp // bb,)
    const = lambda i: (0, 0)   # weights/biases: same full block every grid step

    in_specs = [pl.BlockSpec((bb, w_size), lambda i: (i, 0))]   # x tile
    for p in params:
        in_specs.append(pl.BlockSpec(p.shape, const))           # full weight/bias

    a_scale = float(alpha) / float(w_size)
    b_scale = float(beta) / float(w_size)

    z_full, score_full = pl.pallas_call(
        functools.partial(_usad_kernel, a_scale, b_scale),
        out_shape=(
            jax.ShapeDtypeStruct((Bp, z_size), x.dtype),
            jax.ShapeDtypeStruct((Bp, 1), jnp.float32),
        ),
        grid_spec=pltpu.PrefetchScalarGridSpec(
            num_scalar_prefetch=0,
            grid=grid,
            in_specs=in_specs,
            out_specs=[
                pl.BlockSpec((bb, z_size), lambda i: (i, 0)),
                pl.BlockSpec((bb, 1), lambda i: (i, 0)),
            ],
        ),
        compiler_params=pltpu.CompilerParams(
            dimension_semantics=("parallel",),
        ),
    )(x, *params)

    return z_full[:B], score_full[:B, 0], None


def init_usad_params(key, w_size, z_size, dtype=jnp.float32):
    """Deterministic init mimicking nn.Linear default U[-1/sqrt(fan_in), 1/sqrt(fan_in)].
    Weights are returned transposed to (in, out); biases as (1, out)."""
    enc_dims = [(w_size, w_size // 2), (w_size // 2, w_size // 4), (w_size // 4, z_size)]
    dec_dims = [(z_size, w_size // 4), (w_size // 4, w_size // 2), (w_size // 2, w_size)]
    params = []
    for fan_in, fan_out in enc_dims + dec_dims + dec_dims:
        key, kw, kb = jax.random.split(key, 3)
        bound = 1.0 / (fan_in ** 0.5)
        w = jax.random.uniform(kw, (fan_in, fan_out), dtype, -bound, bound)
        b = jax.random.uniform(kb, (1, fan_out), dtype, -bound, bound)
        params.extend([w, b])
    return tuple(params)


def _reference_forward(x, params, alpha=0.5, beta=0.5):
    """Plain-JAX reference of the same math."""
    def mlp(h, p, final):
        w1, b1, w2, b2, w3, b3 = p
        h = jnp.maximum(h @ w1 + b1, 0.0)
        h = jnp.maximum(h @ w2 + b2, 0.0)
        return final(h @ w3 + b3)

    z = mlp(x, params[0:6], lambda t: jnp.maximum(t, 0.0))
    w1 = mlp(z, params[6:12], jax.nn.sigmoid)
    w2 = mlp(z, params[12:18], jax.nn.sigmoid)
    score = alpha * jnp.mean((x - w1) ** 2, axis=1) + beta * jnp.mean((x - w2) ** 2, axis=1)
    return z, score


if __name__ == "__main__":
    # Small shapes consistent with UsadModel(w_size=128, z_size=32).
    w_size = 128
    z_size = 32

    key = jax.random.PRNGKey(0)
    key, kx, kx2 = jax.random.split(key, 3)
    params = init_usad_params(key, w_size, z_size)

    # Aligned batch.
    batch = 16
    x = jax.random.normal(kx, (batch, w_size), jnp.float32)
    z, score, _ = usad_forward(x, params)
    z = jax.block_until_ready(z)
    score = jax.block_until_ready(score)

    z_ref, score_ref = _reference_forward(x, params)
    assert z.shape == (batch, z_size)
    assert score.shape == (batch,)
    assert jnp.allclose(z, z_ref, atol=1e-5, rtol=1e-5), "z mismatch vs reference"
    assert jnp.allclose(score, score_ref, atol=1e-5, rtol=1e-5), "score mismatch vs reference"

    # Ragged batch (exercises the zero-pad + slice path).
    batch2 = 13
    x2 = jax.random.normal(kx2, (batch2, w_size), jnp.float32)
    z2, score2, _ = usad_forward(x2, params)
    z2 = jax.block_until_ready(z2)
    score2 = jax.block_until_ready(score2)
    z2_ref, score2_ref = _reference_forward(x2, params)
    assert z2.shape == (batch2, z_size) and score2.shape == (batch2,)
    assert jnp.allclose(z2, z2_ref, atol=1e-5, rtol=1e-5), "ragged z mismatch vs reference"
    assert jnp.allclose(score2, score2_ref, atol=1e-5, rtol=1e-5), "ragged score mismatch"

    print("KERNEL_OK")
</pallas_src>

<mosaic_0001>
module attributes {stable_mosaic.version = 11 : i64} {
  func.func @_usad_kernel(%arg0: i32, %arg1: memref<16x128xf32, #tpu.memory_space<vmem>>, %arg2: memref<128x64xf32, #tpu.memory_space<vmem>>, %arg3: memref<1x64xf32, #tpu.memory_space<vmem>>, %arg4: memref<64x32xf32, #tpu.memory_space<vmem>>, %arg5: memref<1x32xf32, #tpu.memory_space<vmem>>, %arg6: memref<32x32xf32, #tpu.memory_space<vmem>>, %arg7: memref<1x32xf32, #tpu.memory_space<vmem>>, %arg8: memref<32x32xf32, #tpu.memory_space<vmem>>, %arg9: memref<1x32xf32, #tpu.memory_space<vmem>>, %arg10: memref<32x64xf32, #tpu.memory_space<vmem>>, %arg11: memref<1x64xf32, #tpu.memory_space<vmem>>, %arg12: memref<64x128xf32, #tpu.memory_space<vmem>>, %arg13: memref<1x128xf32, #tpu.memory_space<vmem>>, %arg14: memref<32x32xf32, #tpu.memory_space<vmem>>, %arg15: memref<1x32xf32, #tpu.memory_space<vmem>>, %arg16: memref<32x64xf32, #tpu.memory_space<vmem>>, %arg17: memref<1x64xf32, #tpu.memory_space<vmem>>, %arg18: memref<64x128xf32, #tpu.memory_space<vmem>>, %arg19: memref<1x128xf32, #tpu.memory_space<vmem>>, %arg20: memref<16x32xf32, #tpu.memory_space<vmem>>, %arg21: memref<16x1xf32, #tpu.memory_space<vmem>>) attributes {dimension_semantics = [#tpu.dimension_semantics<parallel>], iteration_bounds = array<i64: 1>, scalar_prefetch = 0 : i64, scratch_operands = 0 : i64, tpu.core_type = #tpu.core_type<tc>, window_params = [{transform_indices = @transform_0, window_bounds = array<i64: 16, 128>}, {pipeline_mode = #tpu.pipeline_mode<synchronous>, transform_indices = @transform_1, window_bounds = array<i64: 128, 64>}, {pipeline_mode = #tpu.pipeline_mode<synchronous>, transform_indices = @transform_2, window_bounds = array<i64: 1, 64>}, {pipeline_mode = #tpu.pipeline_mode<synchronous>, transform_indices = @transform_3, window_bounds = array<i64: 64, 32>}, {pipeline_mode = #tpu.pipeline_mode<synchronous>, transform_indices = @transform_4, window_bounds = array<i64: 1, 32>}, {pipeline_mode = #tpu.pipeline_mode<synchronous>, transform_indices = @transform_5, window_bounds = array<i64: 32, 32>}, {pipeline_mode = #tpu.pipeline_mode<synchronous>, transform_indices = @transform_6, window_bounds = array<i64: 1, 32>}, {pipeline_mode = #tpu.pipeline_mode<synchronous>, transform_indices = @transform_7, window_bounds = array<i64: 32, 32>}, {pipeline_mode = #tpu.pipeline_mode<synchronous>, transform_indices = @transform_8, window_bounds = array<i64: 1, 32>}, {pipeline_mode = #tpu.pipeline_mode<synchronous>, transform_indices = @transform_9, window_bounds = array<i64: 32, 64>}, {pipeline_mode = #tpu.pipeline_mode<synchronous>, transform_indices = @transform_10, window_bounds = array<i64: 1, 64>}, {pipeline_mode = #tpu.pipeline_mode<synchronous>, transform_indices = @transform_11, window_bounds = array<i64: 64, 128>}, {pipeline_mode = #tpu.pipeline_mode<synchronous>, transform_indices = @transform_12, window_bounds = array<i64: 1, 128>}, {pipeline_mode = #tpu.pipeline_mode<synchronous>, transform_indices = @transform_13, window_bounds = array<i64: 32, 32>}, {pipeline_mode = #tpu.pipeline_mode<synchronous>, transform_indices = @transform_14, window_bounds = array<i64: 1, 32>}, {pipeline_mode = #tpu.pipeline_mode<synchronous>, transform_indices = @transform_15, window_bounds = array<i64: 32, 64>}, {pipeline_mode = #tpu.pipeline_mode<synchronous>, transform_indices = @transform_16, window_bounds = array<i64: 1, 64>}, {pipeline_mode = #tpu.pipeline_mode<synchronous>, transform_indices = @transform_17, window_bounds = array<i64: 64, 128>}, {pipeline_mode = #tpu.pipeline_mode<synchronous>, transform_indices = @transform_18, window_bounds = array<i64: 1, 128>}, {transform_indices = @transform_19, window_bounds = array<i64: 16, 32>}, {transform_indices = @transform_20, window_bounds = array<i64: 16, 1>}]} {
    %c0 = arith.constant 0 : index
    %c0_0 = arith.constant 0 : index
    %0 = vector.load %arg1[%c0, %c0_0] : memref<16x128xf32, #tpu.memory_space<vmem>>, vector<16x128xf32>
    %c0_1 = arith.constant 0 : index
    %c0_2 = arith.constant 0 : index
    %1 = vector.load %arg2[%c0_1, %c0_2] : memref<128x64xf32, #tpu.memory_space<vmem>>, vector<128x64xf32>
    %c0_3 = arith.constant 0 : index
    %c0_4 = arith.constant 0 : index
    %2 = vector.load %arg3[%c0_3, %c0_4] : memref<1x64xf32, #tpu.memory_space<vmem>>, vector<1x64xf32>
    %c0_5 = arith.constant 0 : index
    %c0_6 = arith.constant 0 : index
    %3 = vector.load %arg4[%c0_5, %c0_6] : memref<64x32xf32, #tpu.memory_space<vmem>>, vector<64x32xf32>
    %c0_7 = arith.constant 0 : index
    %c0_8 = arith.constant 0 : index
    %4 = vector.load %arg5[%c0_7, %c0_8] : memref<1x32xf32, #tpu.memory_space<vmem>>, vector<1x32xf32>
    %c0_9 = arith.constant 0 : index
    %c0_10 = arith.constant 0 : index
    %5 = vector.load %arg6[%c0_9, %c0_10] : memref<32x32xf32, #tpu.memory_space<vmem>>, vector<32x32xf32>
    %c0_11 = arith.constant 0 : index
    %c0_12 = arith.constant 0 : index
    %6 = vector.load %arg7[%c0_11, %c0_12] : memref<1x32xf32, #tpu.memory_space<vmem>>, vector<1x32xf32>
    %cst = arith.constant dense<0.000000e+00> : vector<16x64xf32>
    %7 = tpu.matmul %0, %1, %cst {dimension_numbers = #tpu.dot_dimension_numbers<[1], [0], [0], [1], [0, 0, 1, 1], [], []>} : vector<16x128xf32>, vector<128x64xf32>, vector<16x64xf32> -> vector<16x64xf32>
    %8 = vector.broadcast %2 : vector<1x64xf32> to vector<16x64xf32>
    %9 = arith.addf %7, %8 : vector<16x64xf32>
    %cst_13 = arith.constant 0.000000e+00 : f32
    %10 = vector.broadcast %cst_13 : f32 to vector<16x64xf32>
    %11 = arith.maximumf %9, %10 : vector<16x64xf32>
    %cst_14 = arith.constant dense<0.000000e+00> : vector<16x32xf32>
    %12 = tpu.matmul %11, %3, %cst_14 {dimension_numbers = #tpu.dot_dimension_numbers<[1], [0], [0], [1], [0, 0, 1, 1], [], []>} : vector<16x64xf32>, vector<64x32xf32>, vector<16x32xf32> -> vector<16x32xf32>
    %13 = vector.broadcast %4 : vector<1x32xf32> to vector<16x32xf32>
    %14 = arith.addf %12, %13 : vector<16x32xf32>
    %cst_15 = arith.constant 0.000000e+00 : f32
    %15 = vector.broadcast %cst_15 : f32 to vector<16x32xf32>
    %16 = arith.maximumf %14, %15 : vector<16x32xf32>
    %cst_16 = arith.constant dense<0.000000e+00> : vector<16x32xf32>
    %17 = tpu.matmul %16, %5, %cst_16 {dimension_numbers = #tpu.dot_dimension_numbers<[1], [0], [0], [1], [0, 0, 1, 1], [], []>} : vector<16x32xf32>, vector<32x32xf32>, vector<16x32xf32> -> vector<16x32xf32>
    %18 = vector.broadcast %6 : vector<1x32xf32> to vector<16x32xf32>
    %19 = arith.addf %17, %18 : vector<16x32xf32>
    %cst_17 = arith.constant 0.000000e+00 : f32
    %20 = vector.broadcast %cst_17 : f32 to vector<16x32xf32>
    %21 = arith.maximumf %19, %20 : vector<16x32xf32>
    %c0_18 = arith.constant 0 : index
    %c0_19 = arith.constant 0 : index
    %22 = vector.load %arg8[%c0_18, %c0_19] : memref<32x32xf32, #tpu.memory_space<vmem>>, vector<32x32xf32>
    %c0_20 = arith.constant 0 : index
    %c0_21 = arith.constant 0 : index
    %23 = vector.load %arg9[%c0_20, %c0_21] : memref<1x32xf32, #tpu.memory_space<vmem>>, vector<1x32xf32>
    %c0_22 = arith.constant 0 : index
    %c0_23 = arith.constant 0 : index
    %24 = vector.load %arg10[%c0_22, %c0_23] : memref<32x64xf32, #tpu.memory_space<vmem>>, vector<32x64xf32>
    %c0_24 = arith.constant 0 : index
    %c0_25 = arith.constant 0 : index
    %25 = vector.load %arg11[%c0_24, %c0_25] : memref<1x64xf32, #tpu.memory_space<vmem>>, vector<1x64xf32>
    %c0_26 = arith.constant 0 : index
    %c0_27 = arith.constant 0 : index
    %26 = vector.load %arg12[%c0_26, %c0_27] : memref<64x128xf32, #tpu.memory_space<vmem>>, vector<64x128xf32>
    %c0_28 = arith.constant 0 : index
    %c0_29 = arith.constant 0 : index
    %27 = vector.load %arg13[%c0_28, %c0_29] : memref<1x128xf32, #tpu.memory_space<vmem>>, vector<1x128xf32>
    %cst_30 = arith.constant dense<0.000000e+00> : vector<16x32xf32>
    %28 = tpu.matmul %21, %22, %cst_30 {dimension_numbers = #tpu.dot_dimension_numbers<[1], [0], [0], [1], [0, 0, 1, 1], [], []>} : vector<16x32xf32>, vector<32x32xf32>, vector<16x32xf32> -> vector<16x32xf32>
    %29 = vector.broadcast %23 : vector<1x32xf32> to vector<16x32xf32>
    %30 = arith.addf %28, %29 : vector<16x32xf32>
    %cst_31 = arith.constant 0.000000e+00 : f32
    %31 = vector.broadcast %cst_31 : f32 to vector<16x32xf32>
    %32 = arith.maximumf %30, %31 : vector<16x32xf32>
    %cst_32 = arith.constant dense<0.000000e+00> : vector<16x64xf32>
    %33 = tpu.matmul %32, %24, %cst_32 {dimension_numbers = #tpu.dot_dimension_numbers<[1], [0], [0], [1], [0, 0, 1, 1], [], []>} : vector<16x32xf32>, vector<32x64xf32>, vector<16x64xf32> -> vector<16x64xf32>
    %34 = vector.broadcast %25 : vector<1x64xf32> to vector<16x64xf32>
    %35 = arith.addf %33, %34 : vector<16x64xf32>
    %cst_33 = arith.constant 0.000000e+00 : f32
    %36 = vector.broadcast %cst_33 : f32 to vector<16x64xf32>
    %37 = arith.maximumf %35, %36 : vector<16x64xf32>
    %cst_34 = arith.constant dense<0.000000e+00> : vector<16x128xf32>
    %38 = tpu.matmul %37, %26, %cst_34 {dimension_numbers = #tpu.dot_dimension_numbers<[1], [0], [0], [1], [0, 0, 1, 1], [], []>} : vector<16x64xf32>, vector<64x128xf32>, vector<16x128xf32> -> vector<16x128xf32>
    %39 = vector.broadcast %27 : vector<1x128xf32> to vector<16x128xf32>
    %40 = arith.addf %38, %39 : vector<16x128xf32>
    %41 = arith.negf %40 : vector<16x128xf32>
    %42 = math.exp %41 : vector<16x128xf32>
    %cst_35 = arith.constant 1.000000e+00 : f32
    %43 = vector.broadcast %cst_35 : f32 to vector<16x128xf32>
    %44 = arith.addf %43, %42 : vector<16x128xf32>
    %45 = arith.divf %43, %44 : vector<16x128xf32>
    %c0_36 = arith.constant 0 : index
    %c0_37 = arith.constant 0 : index
    %46 = vector.load %arg14[%c0_36, %c0_37] : memref<32x32xf32, #tpu.memory_space<vmem>>, vector<32x32xf32>
    %c0_38 = arith.constant 0 : index
    %c0_39 = arith.constant 0 : index
    %47 = vector.load %arg15[%c0_38, %c0_39] : memref<1x32xf32, #tpu.memory_space<vmem>>, vector<1x32xf32>
    %c0_40 = arith.constant 0 : index
    %c0_41 = arith.constant 0 : index
    %48 = vector.load %arg16[%c0_40, %c0_41] : memref<32x64xf32, #tpu.memory_space<vmem>>, vector<32x64xf32>
    %c0_42 = arith.constant 0 : index
    %c0_43 = arith.constant 0 : index
    %49 = vector.load %arg17[%c0_42, %c0_43] : memref<1x64xf32, #tpu.memory_space<vmem>>, vector<1x64xf32>
    %c0_44 = arith.constant 0 : index
    %c0_45 = arith.constant 0 : index
    %50 = vector.load %arg18[%c0_44, %c0_45] : memref<64x128xf32, #tpu.memory_space<vmem>>, vector<64x128xf32>
    %c0_46 = arith.constant 0 : index
    %c0_47 = arith.constant 0 : index
    %51 = vector.load %arg19[%c0_46, %c0_47] : memref<1x128xf32, #tpu.memory_space<vmem>>, vector<1x128xf32>
    %cst_48 = arith.constant dense<0.000000e+00> : vector<16x32xf32>
    %52 = tpu.matmul %21, %46, %cst_48 {dimension_numbers = #tpu.dot_dimension_numbers<[1], [0], [0], [1], [0, 0, 1, 1], [], []>} : vector<16x32xf32>, vector<32x32xf32>, vector<16x32xf32> -> vector<16x32xf32>
    %53 = vector.broadcast %47 : vector<1x32xf32> to vector<16x32xf32>
    %54 = arith.addf %52, %53 : vector<16x32xf32>
    %cst_49 = arith.constant 0.000000e+00 : f32
    %55 = vector.broadcast %cst_49 : f32 to vector<16x32xf32>
    %56 = arith.maximumf %54, %55 : vector<16x32xf32>
    %cst_50 = arith.constant dense<0.000000e+00> : vector<16x64xf32>
    %57 = tpu.matmul %56, %48, %cst_50 {dimension_numbers = #tpu.dot_dimension_numbers<[1], [0], [0], [1], [0, 0, 1, 1], [], []>} : vector<16x32xf32>, vector<32x64xf32>, vector<16x64xf32> -> vector<16x64xf32>
    %58 = vector.broadcast %49 : vector<1x64xf32> to vector<16x64xf32>
    %59 = arith.addf %57, %58 : vector<16x64xf32>
    %cst_51 = arith.constant 0.000000e+00 : f32
    %60 = vector.broadcast %cst_51 : f32 to vector<16x64xf32>
    %61 = arith.maximumf %59, %60 : vector<16x64xf32>
    %cst_52 = arith.constant dense<0.000000e+00> : vector<16x128xf32>
    %62 = tpu.matmul %61, %50, %cst_52 {dimension_numbers = #tpu.dot_dimension_numbers<[1], [0], [0], [1], [0, 0, 1, 1], [], []>} : vector<16x64xf32>, vector<64x128xf32>, vector<16x128xf32> -> vector<16x128xf32>
    %63 = vector.broadcast %51 : vector<1x128xf32> to vector<16x128xf32>
    %64 = arith.addf %62, %63 : vector<16x128xf32>
    %65 = arith.negf %64 : vector<16x128xf32>
    %66 = math.exp %65 : vector<16x128xf32>
    %cst_53 = arith.constant 1.000000e+00 : f32
    %67 = vector.broadcast %cst_53 : f32 to vector<16x128xf32>
    %68 = arith.addf %67, %66 : vector<16x128xf32>
    %69 = arith.divf %67, %68 : vector<16x128xf32>
    %c0_54 = arith.constant 0 : index
    %c0_55 = arith.constant 0 : index
    %70 = vector.load %arg20[%c0_54, %c0_55] : memref<16x32xf32, #tpu.memory_space<vmem>>, vector<16x32xf32>
    tpu.vector_store %arg20[%c0_54, %c0_55], %21 {strides = array<i32>} : memref<16x32xf32, #tpu.memory_space<vmem>>, vector<16x32xf32>,
    %71 = arith.subf %0, %45 : vector<16x128xf32>
    %72 = arith.subf %0, %69 : vector<16x128xf32>
    %73 = arith.mulf %71, %71 : vector<16x128xf32>
    %cst_56 = arith.constant dense<0.000000e+00> : vector<16xf32>
    %74 = vector.multi_reduction <add>, %73, %cst_56 [1] : vector<16x128xf32> to vector<16xf32>
    %75 = vector.shape_cast %74 : vector<16xf32> to vector<16x1xf32>
    %76 = arith.mulf %72, %72 : vector<16x128xf32>
    %cst_57 = arith.constant dense<0.000000e+00> : vector<16xf32>
    %77 = vector.multi_reduction <add>, %76, %cst_57 [1] : vector<16x128xf32> to vector<16xf32>
    %78 = vector.shape_cast %77 : vector<16xf32> to vector<16x1xf32>
    %cst_58 = arith.constant 3.906250e-03 : f32
    %79 = vector.broadcast %cst_58 : f32 to vector<16x1xf32>
    %80 = arith.mulf %79, %75 : vector<16x1xf32>
    %cst_59 = arith.constant 3.906250e-03 : f32
    %81 = vector.broadcast %cst_59 : f32 to vector<16x1xf32>
    %82 = arith.mulf %81, %78 : vector<16x1xf32>
    %83 = arith.addf %80, %82 : vector<16x1xf32>
    %c0_60 = arith.constant 0 : index
    %c0_61 = arith.constant 0 : index
    %84 = vector.load %arg21[%c0_60, %c0_61] : memref<16x1xf32, #tpu.memory_space<vmem>>, vector<16x1xf32>
    tpu.vector_store %arg21[%c0_60, %c0_61], %83 {strides = array<i32>} : memref<16x1xf32, #tpu.memory_space<vmem>>, vector<16x1xf32>,
    return
  }
  func.func @transform_0(%arg0: i32) -> (i32, i32) {
    %c0_i32 = arith.constant 0 : i32
    %c0_i32_0 = arith.constant 0 : i32
    return %arg0, %c0_i32 : i32, i32
  }
  func.func @transform_1(%arg0: i32) -> (i32, i32) {
    %c0_i32 = arith.constant 0 : i32
    %c0_i32_0 = arith.constant 0 : i32
    %c0_i32_1 = arith.constant 0 : i32
    return %c0_i32, %c0_i32_0 : i32, i32
  }
  func.func @transform_2(%arg0: i32) -> (i32, i32) {
    %c0_i32 = arith.constant 0 : i32
    %c0_i32_0 = arith.constant 0 : i32
    %c0_i32_1 = arith.constant 0 : i32
    return %c0_i32, %c0_i32_0 : i32, i32
  }
  func.func @transform_3(%arg0: i32) -> (i32, i32) {
    %c0_i32 = arith.constant 0 : i32
    %c0_i32_0 = arith.constant 0 : i32
    %c0_i32_1 = arith.constant 0 : i32
    return %c0_i32, %c0_i32_0 : i32, i32
  }
  func.func @transform_4(%arg0: i32) -> (i32, i32) {
    %c0_i32 = arith.constant 0 : i32
    %c0_i32_0 = arith.constant 0 : i32
    %c0_i32_1 = arith.constant 0 : i32
    return %c0_i32, %c0_i32_0 : i32, i32
  }
  func.func @transform_5(%arg0: i32) -> (i32, i32) {
    %c0_i32 = arith.constant 0 : i32
    %c0_i32_0 = arith.constant 0 : i32
    %c0_i32_1 = arith.constant 0 : i32
    return %c0_i32, %c0_i32_0 : i32, i32
  }
  func.func @transform_6(%arg0: i32) -> (i32, i32) {
    %c0_i32 = arith.constant 0 : i32
    %c0_i32_0 = arith.constant 0 : i32
    %c0_i32_1 = arith.constant 0 : i32
    return %c0_i32, %c0_i32_0 : i32, i32
  }
  func.func @transform_7(%arg0: i32) -> (i32, i32) {
    %c0_i32 = arith.constant 0 : i32
    %c0_i32_0 = arith.constant 0 : i32
    %c0_i32_1 = arith.constant 0 : i32
    return %c0_i32, %c0_i32_0 : i32, i32
  }
  func.func @transform_8(%arg0: i32) -> (i32, i32) {
    %c0_i32 = arith.constant 0 : i32
    %c0_i32_0 = arith.constant 0 : i32
    %c0_i32_1 = arith.constant 0 : i32
    return %c0_i32, %c0_i32_0 : i32, i32
  }
  func.func @transform_9(%arg0: i32) -> (i32, i32) {
    %c0_i32 = arith.constant 0 : i32
    %c0_i32_0 = arith.constant 0 : i32
    %c0_i32_1 = arith.constant 0 : i32
    return %c0_i32, %c0_i32_0 : i32, i32
  }
  func.func @transform_10(%arg0: i32) -> (i32, i32) {
    %c0_i32 = arith.constant 0 : i32
    %c0_i32_0 = arith.constant 0 : i32
    %c0_i32_1 = arith.constant 0 : i32
    return %c0_i32, %c0_i32_0 : i32, i32
  }
  func.func @transform_11(%arg0: i32) -> (i32, i32) {
    %c0_i32 = arith.constant 0 : i32
    %c0_i32_0 = arith.constant 0 : i32
    %c0_i32_1 = arith.constant 0 : i32
    return %c0_i32, %c0_i32_0 : i32, i32
  }
  func.func @transform_12(%arg0: i32) -> (i32, i32) {
    %c0_i32 = arith.constant 0 : i32
    %c0_i32_0 = arith.constant 0 : i32
    %c0_i32_1 = arith.constant 0 : i32
    return %c0_i32, %c0_i32_0 : i32, i32
  }
  func.func @transform_13(%arg0: i32) -> (i32, i32) {
    %c0_i32 = arith.constant 0 : i32
    %c0_i32_0 = arith.constant 0 : i32
    %c0_i32_1 = arith.constant 0 : i32
    return %c0_i32, %c0_i32_0 : i32, i32
  }
  func.func @transform_14(%arg0: i32) -> (i32, i32) {
    %c0_i32 = arith.constant 0 : i32
    %c0_i32_0 = arith.constant 0 : i32
    %c0_i32_1 = arith.constant 0 : i32
    return %c0_i32, %c0_i32_0 : i32, i32
  }
  func.func @transform_15(%arg0: i32) -> (i32, i32) {
    %c0_i32 = arith.constant 0 : i32
    %c0_i32_0 = arith.constant 0 : i32
    %c0_i32_1 = arith.constant 0 : i32
    return %c0_i32, %c0_i32_0 : i32, i32
  }
  func.func @transform_16(%arg0: i32) -> (i32, i32) {
    %c0_i32 = arith.constant 0 : i32
    %c0_i32_0 = arith.constant 0 : i32
    %c0_i32_1 = arith.constant 0 : i32
    return %c0_i32, %c0_i32_0 : i32, i32
  }
  func.func @transform_17(%arg0: i32) -> (i32, i32) {
    %c0_i32 = arith.constant 0 : i32
    %c0_i32_0 = arith.constant 0 : i32
    %c0_i32_1 = arith.constant 0 : i32
    return %c0_i32, %c0_i32_0 : i32, i32
  }
  func.func @transform_18(%arg0: i32) -> (i32, i32) {
    %c0_i32 = arith.constant 0 : i32
    %c0_i32_0 = arith.constant 0 : i32
    %c0_i32_1 = arith.constant 0 : i32
    return %c0_i32, %c0_i32_0 : i32, i32
  }
  func.func @transform_19(%arg0: i32) -> (i32, i32) {
    %c0_i32 = arith.constant 0 : i32
    %c0_i32_0 = arith.constant 0 : i32
    return %arg0, %c0_i32 : i32, i32
  }
  func.func @transform_20(%arg0: i32) -> (i32, i32) {
    %c0_i32 = arith.constant 0 : i32
    %c0_i32_0 = arith.constant 0 : i32
    return %arg0, %c0_i32 : i32, i32
  }
}

</mosaic_0001>

<llo_original>
// kernel: usad_forward.1
$region0: #{usad_forward.1}
  #allocation0 [shape = 'u32[]', space=smem, size = 0x4, offset = 0x4, fixed_abs, tag = 'smem constant byte address 0x4 - core index']
  #allocation1 [shape = 'u32[144,128]{1,0:T(1,128)}', space=vmem, size = 0x12000, scoped, tag = 'internal scratch']
  %s0 = inlined_call_operand.hbm [shape: f32[16,128], index: 0, kind: input, shape index: {}]
  %s1 = inlined_call_operand.vmem [shape: f32[128,64], index: 1, kind: input, shape index: {}]
  %s2 = inlined_call_operand.vmem [shape: f32[1,64], index: 2, kind: input, shape index: {}]
  %s3 = inlined_call_operand.vmem [shape: f32[64,32], index: 3, kind: input, shape index: {}]
  %s4 = inlined_call_operand.vmem [shape: f32[1,32], index: 4, kind: input, shape index: {}]
  %s5 = inlined_call_operand.vmem [shape: f32[32,32], index: 5, kind: input, shape index: {}]
  %s6 = inlined_call_operand.hbm [shape: f32[1,32], index: 6, kind: input, shape index: {}]
  %s7 = inlined_call_operand.vmem [shape: f32[32,32], index: 7, kind: input, shape index: {}]
  %s8 = inlined_call_operand.hbm [shape: f32[1,32], index: 8, kind: input, shape index: {}]
  %s9 = inlined_call_operand.vmem [shape: f32[32,64], index: 9, kind: input, shape index: {}]
  %s10 = inlined_call_operand.vmem [shape: f32[1,64], index: 10, kind: input, shape index: {}]
  %s11 = inlined_call_operand.vmem [shape: f32[64,128], index: 11, kind: input, shape index: {}]
  %s12 = inlined_call_operand.vmem [shape: f32[1,128], index: 12, kind: input, shape index: {}]
  %s13 = inlined_call_operand.vmem [shape: f32[32,32], index: 13, kind: input, shape index: {}]
  %s14 = inlined_call_operand.vmem [shape: f32[1,32], index: 14, kind: input, shape index: {}]
  %s15 = inlined_call_operand.hbm [shape: f32[32,64], index: 15, kind: input, shape index: {}]
  %s16 = inlined_call_operand.vmem [shape: f32[1,64], index: 16, kind: input, shape index: {}]
  %s17 = inlined_call_operand.vmem [shape: f32[64,128], index: 17, kind: input, shape index: {}]
  %s18 = inlined_call_operand.vmem [shape: f32[1,128], index: 18, kind: input, shape index: {}]
  %s19 = inlined_call_operand.hbm [shape: f32[16,32], index: 19, kind: output, shape index: {0}]
  %s20 = inlined_call_operand.vmem [shape: f32[16,1], index: 20, kind: output, shape index: {1}]
  %21 = xla_tuple %s19, %s20
  %s22 = sld [smem:[#allocation0]]
  $region110: #{usad_forward.1} parent=0
    _
  %s24 = ssub.s32 1, %s22
  %s25 = scalar_select 0, %s24, %s22
  $region1: #{usad_forward.1} parent=0
    #allocation2 [shape = 'u8[8192]{0}', space=vmem, size = 0x2000, scoped, tag = 'input window, operand 0, single buffered']
    #allocation3 [shape = 's32[1]{0}', space=sflag, size = 0x4, scoped, tag = 'scoped memory for usad_forward.1']
    #allocation4 [shape = 's32[1]{0}', space=sflag, size = 0x4, scoped, tag = 'scoped memory for usad_forward.1']
    #allocation5 [shape = 'u8[512]{0}', space=vmem, size = 0x400, scoped, tag = 'input window, operand 6, single buffered']
    #allocation6 [shape = 's32[1]{0}', space=sflag, size = 0x4, scoped, tag = 'scoped memory for usad_forward.1']
    #allocation7 [shape = 'u8[512]{0}', space=vmem, size = 0x400, scoped, tag = 'input window, operand 8, single buffered']
    #allocation8 [shape = 'u8[16384]{0}', space=vmem, size = 0x4000, scoped, tag = 'input window, operand 15, single buffered']
    #allocation9 [shape = 's32[1]{0}', space=sflag, size = 0x4, scoped, tag = 'scoped memory for usad_forward.1']
    #allocation10 [shape = 'u8[8192]{0}', space=vmem, size = 0x2000, scoped, tag = 'output window, operand 0, single buffered']
    %26 = vsyncpa [#allocation3], 0
    %27 = vsyncpa [#allocation6], 0
    %28 = vsyncpa [#allocation9], 0
    %29 = vsyncpa [#allocation4], 0
    // Predicated region
    $region2: #{usad_forward.1} parent=1 // pred_check
      _
    $region3: #{usad_forward.1} parent=1 // pred_check_branch
      %31 = sbr.rel (0) target = $region5
    $region4: #{usad_forward.1} parent=1 // pred_region
      %s33 = ssub.s32 256, 256
      %34 = vsyncadd [#allocation3], %s33
      %s35 = sshll.u32 [#allocation2], 4
      %s36 = int_to_ptr.vmem [resolvable:$true] %s35
      %41 = dma.hbm_to_vmem [thread:$0]  %s0, 256, %s36, [#allocation3], 128, 128, 8
    $region5: #{usad_forward.1} parent=1 // pred_fallthru
      _
    // Predicated region
    $region6: #{usad_forward.1} parent=1 // pred_check
      _
    $region7: #{usad_forward.1} parent=1 // pred_check_branch
      %43 = sbr.rel (0) target = $region9
    $region8: #{usad_forward.1} parent=1 // pred_region
      _
    $region9: #{usad_forward.1} parent=1 // pred_fallthru
      _
    // Predicated region
    $region10: #{usad_forward.1} parent=1 // pred_check
      _
    $region11: #{usad_forward.1} parent=1 // pred_check_branch
      %45 = sbr.rel (0) target = $region13
    $region12: #{usad_forward.1} parent=1 // pred_region
      _
    $region13: #{usad_forward.1} parent=1 // pred_fallthru
      _
    // Predicated region
    $region14: #{usad_forward.1} parent=1 // pred_check
      _
    $region15: #{usad_forward.1} parent=1 // pred_check_branch
      %47 = sbr.rel (0) target = $region17
    $region16: #{usad_forward.1} parent=1 // pred_region
      _
    $region17: #{usad_forward.1} parent=1 // pred_fallthru
      _
    // Predicated region
    $region18: #{usad_forward.1} parent=1 // pred_check
      _
    $region19: #{usad_forward.1} parent=1 // pred_check_branch
      %49 = sbr.rel (0) target = $region21
    $region20: #{usad_forward.1} parent=1 // pred_region
      _
    $region21: #{usad_forward.1} parent=1 // pred_fallthru
      _
    // Predicated region
    $region22: #{usad_forward.1} parent=1 // pred_check
      _
    $region23: #{usad_forward.1} parent=1 // pred_check_branch
      %51 = sbr.rel (0) target = $region25
    $region24: #{usad_forward.1} parent=1 // pred_region
      _
    $region25: #{usad_forward.1} parent=1 // pred_fallthru
      _
    // Predicated region
    $region26: #{usad_forward.1} parent=1 // pred_check
      _
    $region27: #{usad_forward.1} parent=1 // pred_check_branch
      %53 = sbr.rel (0) target = $region29
    $region28: #{usad_forward.1} parent=1 // pred_region
      %s55 = ssub.s32 16, 16
      %56 = vsyncadd [#allocation6], %s55
      %s58 = sshll.u32 [#allocation5], 4
      %s59 = int_to_ptr.vmem [resolvable:$true] %s58
      %61 = dma.hbm_to_vmem [thread:$0]  %s6, 16, %s59, [#allocation6]
    $region29: #{usad_forward.1} parent=1 // pred_fallthru
      _
    // Predicated region
    $region30: #{usad_forward.1} parent=1 // pred_check
      _
    $region31: #{usad_forward.1} parent=1 // pred_check_branch
      %63 = sbr.rel (0) target = $region33
    $region32: #{usad_forward.1} parent=1 // pred_region
      _
    $region33: #{usad_forward.1} parent=1 // pred_fallthru
      _
    // Predicated region
    $region34: #{usad_forward.1} parent=1 // pred_check
      _
    $region35: #{usad_forward.1} parent=1 // pred_check_branch
      %65 = sbr.rel (0) target = $region37
    $region36: #{usad_forward.1} parent=1 // pred_region
      %s67 = ssub.s32 16, 16
      %68 = vsyncadd [#allocation6], %s67
      %s70 = sshll.u32 [#allocation7], 4
      %s71 = int_to_ptr.vmem [resolvable:$true] %s70
      %73 = dma.hbm_to_vmem [thread:$0]  %s8, 16, %s71, [#allocation6]
    $region37: #{usad_forward.1} parent=1 // pred_fallthru
      _
    // Predicated region
    $region38: #{usad_forward.1} parent=1 // pred_check
      _
    $region39: #{usad_forward.1} parent=1 // pred_check_branch
      %75 = sbr.rel (0) target = $region41
    $region40: #{usad_forward.1} parent=1 // pred_region
      _
    $region41: #{usad_forward.1} parent=1 // pred_fallthru
      _
    // Predicated region
    $region42: #{usad_forward.1} parent=1 // pred_check
      _
    $region43: #{usad_forward.1} parent=1 // pred_check_branch
      %77 = sbr.rel (0) target = $region45
    $region44: #{usad_forward.1} parent=1 // pred_region
      _
    $region45: #{usad_forward.1} parent=1 // pred_fallthru
      _
    // Predicated region
    $region46: #{usad_forward.1} parent=1 // pred_check
      _
    $region47: #{usad_forward.1} parent=1 // pred_check_branch
      %79 = sbr.rel (0) target = $region49
    $region48: #{usad_forward.1} parent=1 // pred_region
      _
    $region49: #{usad_forward.1} parent=1 // pred_fallthru
      _
    // Predicated region
    $region50: #{usad_forward.1} parent=1 // pred_check
      _
    $region51: #{usad_forward.1} parent=1 // pred_check_branch
      %81 = sbr.rel (0) target = $region53
    $region52: #{usad_forward.1} parent=1 // pred_region
      _
    $region53: #{usad_forward.1} parent=1 // pred_fallthru
      _
    // Predicated region
    $region54: #{usad_forward.1} parent=1 // pred_check
      _
    $region55: #{usad_forward.1} parent=1 // pred_check_branch
      %83 = sbr.rel (0) target = $region57
    $region56: #{usad_forward.1} parent=1 // pred_region
      _
    $region57: #{usad_forward.1} parent=1 // pred_fallthru
      _
    // Predicated region
    $region58: #{usad_forward.1} parent=1 // pred_check
      _
    $region59: #{usad_forward.1} parent=1 // pred_check_branch
      %85 = sbr.rel (0) target = $region61
    $region60: #{usad_forward.1} parent=1 // pred_region
      _
    $region61: #{usad_forward.1} parent=1 // pred_fallthru
      _
    // Predicated region
    $region62: #{usad_forward.1} parent=1 // pred_check
      _
    $region63: #{usad_forward.1} parent=1 // pred_check_branch
      %87 = sbr.rel (0) target = $region65
    $region64: #{usad_forward.1} parent=1 // pred_region
      %s89 = ssub.s32 512, 512
      %90 = vsyncadd [#allocation9], %s89
      %s91 = sshll.u32 [#allocation8], 4
      %s92 = int_to_ptr.vmem [resolvable:$true] %s91
      %97 = dma.hbm_to_vmem [thread:$0]  %s15, 512, %s92, [#allocation9], 128, 128, 8
    $region65: #{usad_forward.1} parent=1 // pred_fallthru
      _
    // Predicated region
    $region66: #{usad_forward.1} parent=1 // pred_check
      _
    $region67: #{usad_forward.1} parent=1 // pred_check_branch
      %99 = sbr.rel (0) target = $region69
    $region68: #{usad_forward.1} parent=1 // pred_region
      _
    $region69: #{usad_forward.1} parent=1 // pred_fallthru
      _
    // Predicated region
    $region70: #{usad_forward.1} parent=1 // pred_check
      _
    $region71: #{usad_forward.1} parent=1 // pred_check_branch
      %101 = sbr.rel (0) target = $region73
    $region72: #{usad_forward.1} parent=1 // pred_region
      _
    $region73: #{usad_forward.1} parent=1 // pred_fallthru
      _
    // Predicated region
    $region74: #{usad_forward.1} parent=1 // pred_check
      _
    $region75: #{usad_forward.1} parent=1 // pred_check_branch
      %103 = sbr.rel (0) target = $region77
    $region76: #{usad_forward.1} parent=1 // pred_region
      _
    $region77: #{usad_forward.1} parent=1 // pred_fallthru
      _
    // Predicated region
    $region78: #{usad_forward.1} parent=1 // pred_check
      _
    $region79: #{usad_forward.1} parent=1 // pred_check_branch
      %105 = sbr.rel (0) target = $region81
    $region80: #{usad_forward.1} parent=1 // pred_region
      %106 = dma.done [#allocation3], 256
    $region81: #{usad_forward.1} parent=1 // pred_fallthru
      _
    // Predicated region
    $region82: #{usad_forward.1} parent=1 // pred_check
      _
    $region83: #{usad_forward.1} parent=1 // pred_check_branch
      %108 = sbr.rel (0) target = $region85
    $region84: #{usad_forward.1} parent=1 // pred_region
      %109 = dma.done [#allocation6], 16
    $region85: #{usad_forward.1} parent=1 // pred_fallthru
      _
    // Predicated region
    $region86: #{usad_forward.1} parent=1 // pred_check
      _
    $region87: #{usad_forward.1} parent=1 // pred_check_branch
      %111 = sbr.rel (0) target = $region89
    $region88: #{usad_forward.1} parent=1 // pred_region
      %112 = dma.done [#allocation6], 16
    $region89: #{usad_forward.1} parent=1 // pred_fallthru
      _
    // Predicated region
    $region90: #{usad_forward.1} parent=1 // pred_check
      _
    $region91: #{usad_forward.1} parent=1 // pred_check_branch
      %114 = sbr.rel (0) target = $region93
    $region92: #{usad_forward.1} parent=1 // pred_region
      %115 = dma.done [#allocation9], 512
    $region93: #{usad_forward.1} parent=1 // pred_fallthru
      _
    %v116 = vld [vmem:[#allocation2] sm:$0xff]
    %v117 = vld [vmem:[#allocation2 + $0x8] sm:$0xff]
    %v118 = vld [vmem:[%s1] sm:$0xff]
    %v119 = vld [vmem:[%s1 + $0x8] sm:$0xff]
    %v120 = vld [vmem:[%s1 + $0x10] sm:$0xff]
    %v121 = vld [vmem:[%s1 + $0x18] sm:$0xff]
    %v122 = vld [vmem:[%s1 + $0x20] sm:$0xff]
    %v123 = vld [vmem:[%s1 + $0x28] sm:$0xff]
    %v124 = vld [vmem:[%s1 + $0x30] sm:$0xff]
    %v125 = vld [vmem:[%s1 + $0x38] sm:$0xff]
    %v126 = vld [vmem:[%s1 + $0x40] sm:$0xff]
    %v127 = vld [vmem:[%s1 + $0x48] sm:$0xff]
    %v128 = vld [vmem:[%s1 + $0x50] sm:$0xff]
    %v129 = vld [vmem:[%s1 + $0x58] sm:$0xff]
    %v130 = vld [vmem:[%s1 + $0x60] sm:$0xff]
    %v131 = vld [vmem:[%s1 + $0x68] sm:$0xff]
    %v132 = vld [vmem:[%s1 + $0x70] sm:$0xff]
    %v133 = vld [vmem:[%s1 + $0x78] sm:$0xff]
    %v134 = vld [vmem:[%s2] sm:$0x1]
    %v135 = vld [vmem:[%s3] sm:$0xff]
    %v136 = vld [vmem:[%s3 + $0x8] sm:$0xff]
    %v137 = vld [vmem:[%s3 + $0x10] sm:$0xff]
    %v138 = vld [vmem:[%s3 + $0x18] sm:$0xff]
    %v139 = vld [vmem:[%s3 + $0x20] sm:$0xff]
    %v140 = vld [vmem:[%s3 + $0x28] sm:$0xff]
    %v141 = vld [vmem:[%s3 + $0x30] sm:$0xff]
    %v142 = vld [vmem:[%s3 + $0x38] sm:$0xff]
    %v143 = vld [vmem:[%s4] sm:$0x1]
    %v144 = vld [vmem:[%s5] sm:$0xff]
    %v145 = vld [vmem:[%s5 + $0x8] sm:$0xff]
    %v146 = vld [vmem:[%s5 + $0x10] sm:$0xff]
    %v147 = vld [vmem:[%s5 + $0x18] sm:$0xff]
    %v148 = vld [vmem:[#allocation5] sm:$0x1]
    %v150 = vlaneseq
    %v151 = vshrl.u32 %v150, 7
    %v152 = vsub.s32 0, %v151
    %v153 = vrot.slane %v134, %v152
    %155 = vmatprep.subr.mxu0 0.0
    %156 = vmatpush1.msra.mxu0 %v118
    %157 = vmatprep.subr.mxu0 0.0
    %158 = vmatpush1.msra.mxu0 %v119
    %159 = vmatprep.subr.mxu0 0.0
    %160 = vmatpush1.msra.mxu0 %v120
    %161 = vmatprep.subr.mxu0 0.0
    %162 = vmatpush1.msra.mxu0 %v121
    %163 = vmatprep.subr.mxu0 0.0
    %164 = vmatpush1.msra.mxu0 %v122
    %165 = vmatprep.subr.mxu0 0.0
    %166 = vmatpush1.msra.mxu0 %v123
    %167 = vmatprep.subr.mxu0 0.0
    %168 = vmatpush1.msra.mxu0 %v124
    %169 = vmatprep.subr.mxu0 0.0
    %170 = vmatpush1.msra.mxu0 %v125
    %171 = vmatprep.subr.mxu0 0.0
    %172 = vmatpush1.msra.mxu0 %v126
    %173 = vmatprep.subr.mxu0 0.0
    %174 = vmatpush1.msra.mxu0 %v127
    %175 = vmatprep.subr.mxu0 0.0
    %176 = vmatpush1.msra.mxu0 %v128
    %177 = vmatprep.subr.mxu0 0.0
    %178 = vmatpush1.msra.mxu0 %v129
    %179 = vmatprep.subr.mxu0 0.0
    %180 = vmatpush1.msra.mxu0 %v130
    %181 = vmatprep.subr.mxu0 0.0
    %182 = vmatpush1.msra.mxu0 %v131
    %183 = vmatprep.subr.mxu0 0.0
    %184 = vmatpush1.msra.mxu0 %v132
    %185 = vmatprep.subr.mxu0 0.0
    %186 = vmatpush1.msra.mxu0 %v133
    %187 = vmatprep.subr.mxu0 0.0
    %188 = vmatpush1.msra.mxu0 0.0
    %189 = vmatprep.subr.mxu0 0.0
    %190 = vmatpush1.msra.mxu0 0.0
    %191 = vmatprep.subr.mxu0 0.0
    %192 = vmatpush1.msra.mxu0 0.0
    %193 = vmatprep.subr.mxu0 0.0
    %194 = vmatpush1.msra.mxu0 0.0
    %195 = vmatprep.subr.mxu0 0.0
    %196 = vmatpush1.msra.mxu0 0.0
    %197 = vmatprep.subr.mxu0 0.0
    %198 = vmatpush1.msra.mxu0 0.0
    %199 = vmatprep.subr.mxu0 0.0
    %200 = vmatpush1.msra.mxu0 0.0
    %201 = vmatprep.subr.mxu0 0.0
    %202 = vmatpush1.msra.mxu0 0.0
    %203 = vmatprep.subr.mxu0 0.0
    %204 = vmatpush1.msra.mxu0 0.0
    %205 = vmatprep.subr.mxu0 0.0
    %206 = vmatpush1.msra.mxu0 0.0
    %207 = vmatprep.subr.mxu0 0.0
    %208 = vmatpush1.msra.mxu0 0.0
    %209 = vmatprep.subr.mxu0 0.0
    %210 = vmatpush1.msra.mxu0 0.0
    %211 = vmatprep.subr.mxu0 0.0
    %212 = vmatpush1.msra.mxu0 0.0
    %213 = vmatprep.subr.mxu0 0.0
    %214 = vmatpush1.msra.mxu0 0.0
    %215 = vmatprep.subr.mxu0 0.0
    %216 = vmatpush1.msra.mxu0 0.0
    %217 = vmatprep.subr.mxu0 0.0
    %218 = vmatpush1.msra.mxu0 0.0
    %219 = vmatprep.mubr.f32.mxu0 0.0
    %220 = vmatmul.mubr.f32.gmra.mrb[0].mxu0 %v116
    %v221 = vpop.f32.mrb[0].mxu0
    %v222 = vadd.f32 %v153, %v221
    %v223 = vpop.f32.mrb[0].mxu0
    %224 = vmatprep.mubr.f32.mxu0 0.0
    %225 = vmatmul.mubr.f32.gmra.mrb[0].mxu0 %v117
    %v226 = vpop.f32.mrb[0].mxu0
    %v227 = vadd.f32 %v153, %v226
    %v228 = vpop.f32.mrb[0].mxu0
    %229 = vdwg.mxu0
    %v230 = vmax.f32 %v222, 0.0
    %v231 = vmax.f32 %v227, 0.0
    %v233 = vlaneseq
    %v234 = vshrl.u32 %v233, 7
    %v235 = vsub.s32 0, %v234
    %v236 = vrot.slane %v143, %v235
    %vm238 = vcmask 523264
    %v240 = vsel %vm238, %v230, 0
    %v243 = vsel %vm238, %v231, 0
    %245 = vmatprep.subr.mxu0 0.0
    %246 = vmatpush1.msra.mxu0 %v135
    %247 = vmatprep.subr.mxu0 0.0
    %248 = vmatpush1.msra.mxu0 %v136
    %249 = vmatprep.subr.mxu0 0.0
    %250 = vmatpush1.msra.mxu0 %v137
    %251 = vmatprep.subr.mxu0 0.0
    %252 = vmatpush1.msra.mxu0 %v138
    %253 = vmatprep.subr.mxu0 0.0
    %254 = vmatpush1.msra.mxu0 %v139
    %255 = vmatprep.subr.mxu0 0.0
    %256 = vmatpush1.msra.mxu0 %v140
    %257 = vmatprep.subr.mxu0 0.0
    %258 = vmatpush1.msra.mxu0 %v141
    %259 = vmatprep.subr.mxu0 0.0
    %260 = vmatpush1.msra.mxu0 %v142
    %261 = vmatprep.subr.mxu0 0.0
    %262 = vmatpush1.msra.mxu0 0.0
    %263 = vmatprep.subr.mxu0 0.0
    %264 = vmatpush1.msra.mxu0 0.0
    %265 = vmatprep.subr.mxu0 0.0
    %266 = vmatpush1.msra.mxu0 0.0
    %267 = vmatprep.subr.mxu0 0.0
    %268 = vmatpush1.msra.mxu0 0.0
    %269 = vmatprep.subr.mxu0 0.0
    %270 = vmatpush1.msra.mxu0 0.0
    %271 = vmatprep.subr.mxu0 0.0
    %272 = vmatpush1.msra.mxu0 0.0
    %273 = vmatprep.subr.mxu0 0.0
    %274 = vmatpush1.msra.mxu0 0.0
    %275 = vmatprep.subr.mxu0 0.0
    %276 = vmatpush1.msra.mxu0 0.0
    %277 = vmatprep.subr.mxu0 0.0
    %278 = vmatpush1.msra.mxu0 0.0
    %279 = vmatprep.subr.mxu0 0.0
    %280 = vmatpush1.msra.mxu0 0.0
    %281 = vmatprep.subr.mxu0 0.0
    %282 = vmatpush1.msra.mxu0 0.0
    %283 = vmatprep.subr.mxu0 0.0
    %284 = vmatpush1.msra.mxu0 0.0
    %285 = vmatprep.subr.mxu0 0.0
    %286 = vmatpush1.msra.mxu0 0.0
    %287 = vmatprep.subr.mxu0 0.0
    %288 = vmatpush1.msra.mxu0 0.0
    %289 = vmatprep.subr.mxu0 0.0
    %290 = vmatpush1.msra.mxu0 0.0
    %291 = vmatprep.subr.mxu0 0.0
    %292 = vmatpush1.msra.mxu0 0.0
    %293 = vmatprep.subr.mxu0 0.0
    %294 = vmatpush1.msra.mxu0 0.0
    %295 = vmatprep.subr.mxu0 0.0
    %296 = vmatpush1.msra.mxu0 0.0
    %297 = vmatprep.subr.mxu0 0.0
    %298 = vmatpush1.msra.mxu0 0.0
    %299 = vmatprep.subr.mxu0 0.0
    %300 = vmatpush1.msra.mxu0 0.0
    %301 = vmatprep.subr.mxu0 0.0
    %302 = vmatpush1.msra.mxu0 0.0
    %303 = vmatprep.subr.mxu0 0.0
    %304 = vmatpush1.msra.mxu0 0.0
    %305 = vmatprep.subr.mxu0 0.0
    %306 = vmatpush1.msra.mxu0 0.0
    %307 = vmatprep.subr.mxu0 0.0
    %308 = vmatpush1.msra.mxu0 0.0
    %309 = vmatprep.mubr.f32.mxu0 0.0
    %310 = vmatmul.mubr.f32.gmra.mrb[0].mxu0 %v240
    %v311 = vpop.f32.mrb[0].mxu0
    %v312 = vadd.f32 %v236, %v311
    %v313 = vpop.f32.mrb[0].mxu0
    %314 = vmatprep.mubr.f32.mxu0 0.0
    %315 = vmatmul.mubr.f32.gmra.mrb[0].mxu0 %v243
    %v316 = vpop.f32.mrb[0].mxu0
    %v317 = vadd.f32 %v236, %v316
    %v318 = vpop.f32.mrb[0].mxu0
    %319 = vdwg.mxu0
    %v320 = vmax.f32 %v312, 0.0
    %v321 = vmax.f32 %v317, 0.0
    %v323 = vlaneseq
    %v324 = vshrl.u32 %v323, 7
    %v325 = vsub.s32 0, %v324
    %v326 = vrot.slane %v148, %v325
    %vm328 = vcmask 261120
    %v330 = vsel %vm328, %v320, 0
    %v333 = vsel %vm328, %v321, 0
    %335 = vmatprep.subr.mxu0 0.0
    %336 = vmatpush1.msra.mxu0 %v144
    %337 = vmatprep.subr.mxu0 0.0
    %338 = vmatpush1.msra.mxu0 %v145
    %339 = vmatprep.subr.mxu0 0.0
    %340 = vmatpush1.msra.mxu0 %v146
    %341 = vmatprep.subr.mxu0 0.0
    %342 = vmatpush1.msra.mxu0 %v147
    %343 = vmatprep.subr.mxu0 0.0
    %344 = vmatpush1.msra.mxu0 0.0
    %345 = vmatprep.subr.mxu0 0.0
    %346 = vmatpush1.msra.mxu0 0.0
    %347 = vmatprep.subr.mxu0 0.0
    %348 = vmatpush1.msra.mxu0 0.0
    %349 = vmatprep.subr.mxu0 0.0
    %350 = vmatpush1.msra.mxu0 0.0
    %351 = vmatprep.subr.mxu0 0.0
    %352 = vmatpush1.msra.mxu0 0.0
    %353 = vmatprep.subr.mxu0 0.0
    %354 = vmatpush1.msra.mxu0 0.0
    %355 = vmatprep.subr.mxu0 0.0
    %356 = vmatpush1.msra.mxu0 0.0
    %357 = vmatprep.subr.mxu0 0.0
    %358 = vmatpush1.msra.mxu0 0.0
    %359 = vmatprep.subr.mxu0 0.0
    %360 = vmatpush1.msra.mxu0 0.0
    %361 = vmatprep.subr.mxu0 0.0
    %362 = vmatpush1.msra.mxu0 0.0
    %363 = vmatprep.subr.mxu0 0.0
    %364 = vmatpush1.msra.mxu0 0.0
    %365 = vmatprep.subr.mxu0 0.0
    %366 = vmatpush1.msra.mxu0 0.0
    %367 = vmatprep.subr.mxu0 0.0
    %368 = vmatpush1.msra.mxu0 0.0
    %369 = vmatprep.subr.mxu0 0.0
    %370 = vmatpush1.msra.mxu0 0.0
    %371 = vmatprep.subr.mxu0 0.0
    %372 = vmatpush1.msra.mxu0 0.0
    %373 = vmatprep.subr.mxu0 0.0
    %374 = vmatpush1.msra.mxu0 0.0
    %375 = vmatprep.subr.mxu0 0.0
    %376 = vmatpush1.msra.mxu0 0.0
    %377 = vmatprep.subr.mxu0 0.0
    %378 = vmatpush1.msra.mxu0 0.0
    %379 = vmatprep.subr.mxu0 0.0
    %380 = vmatpush1.msra.mxu0 0.0
    %381 = vmatprep.subr.mxu0 0.0
    %382 = vmatpush1.msra.mxu0 0.0
    %383 = vmatprep.subr.mxu0 0.0
    %384 = vmatpush1.msra.mxu0 0.0
    %385 = vmatprep.subr.mxu0 0.0
    %386 = vmatpush1.msra.mxu0 0.0
    %387 = vmatprep.subr.mxu0 0.0
    %388 = vmatpush1.msra.mxu0 0.0
    %389 = vmatprep.subr.mxu0 0.0
    %390 = vmatpush1.msra.mxu0 0.0
    %391 = vmatprep.subr.mxu0 0.0
    %392 = vmatpush1.msra.mxu0 0.0
    %393 = vmatprep.subr.mxu0 0.0
    %394 = vmatpush1.msra.mxu0 0.0
    %395 = vmatprep.subr.mxu0 0.0
    %396 = vmatpush1.msra.mxu0 0.0
    %397 = vmatprep.subr.mxu0 0.0
    %398 = vmatpush1.msra.mxu0 0.0
    %399 = vmatprep.mubr.f32.mxu0 0.0
    %400 = vmatmul.mubr.f32.gmra.mrb[0].mxu0 %v330
    %v401 = vpop.f32.mrb[0].mxu0
    %v402 = vadd.f32 %v326, %v401
    %v403 = vpop.f32.mrb[0].mxu0
    %404 = vmatprep.mubr.f32.mxu0 0.0
    %405 = vmatmul.mubr.f32.gmra.mrb[0].mxu0 %v333
    %v406 = vpop.f32.mrb[0].mxu0
    %v407 = vadd.f32 %v326, %v406
    %v408 = vpop.f32.mrb[0].mxu0
    %409 = vdwg.mxu0
    %v410 = vmax.f32 %v402, 0.0
    %v411 = vmax.f32 %v407, 0.0
    %v412 = vld [vmem:[%s7] sm:$0xff]
    %v413 = vld [vmem:[%s7 + $0x8] sm:$0xff]
    %v414 = vld [vmem:[%s7 + $0x10] sm:$0xff]
    %v415 = vld [vmem:[%s7 + $0x18] sm:$0xff]
    %v416 = vld [vmem:[#allocation7] sm:$0x1]
    %v417 = vld [vmem:[%s9] sm:$0xff]
    %v418 = vld [vmem:[%s9 + $0x8] sm:$0xff]
    %v419 = vld [vmem:[%s9 + $0x10] sm:$0xff]
    %v420 = vld [vmem:[%s9 + $0x18] sm:$0xff]
    %v421 = vld [vmem:[%s10] sm:$0x1]
    %v422 = vld [vmem:[%s11] sm:$0xff]
    %v423 = vld [vmem:[%s11 + $0x8] sm:$0xff]
    %v424 = vld [vmem:[%s11 + $0x10] sm:$0xff]
    %v425 = vld [vmem:[%s11 + $0x18] sm:$0xff]
    %v426 = vld [vmem:[%s11 + $0x20] sm:$0xff]
    %v427 = vld [vmem:[%s11 + $0x28] sm:$0xff]
    %v428 = vld [vmem:[%s11 + $0x30] sm:$0xff]
    %v429 = vld [vmem:[%s11 + $0x38] sm:$0xff]
    %v430 = vld [vmem:[%s12] sm:$0x1]
    %v432 = vlaneseq
    %v433 = vshrl.u32 %v432, 7
    %v434 = vsub.s32 0, %v433
    %v435 = vrot.slane %v416, %v434
    %v438 = vsel %vm328, %v410, 0
    %v441 = vsel %vm328, %v411, 0
    %443 = vmatprep.subr.mxu0 0.0
    %444 = vmatpush1.msra.mxu0 %v412
    %445 = vmatprep.subr.mxu0 0.0
    %446 = vmatpush1.msra.mxu0 %v413
    %447 = vmatprep.subr.mxu0 0.0
    %448 = vmatpush1.msra.mxu0 %v414
    %449 = vmatprep.subr.mxu0 0.0
    %450 = vmatpush1.msra.mxu0 %v415
    %451 = vmatprep.subr.mxu0 0.0
    %452 = vmatpush1.msra.mxu0 0.0
    %453 = vmatprep.subr.mxu0 0.0
    %454 = vmatpush1.msra.mxu0 0.0
    %455 = vmatprep.subr.mxu0 0.0
    %456 = vmatpush1.msra.mxu0 0.0
    %457 = vmatprep.subr.mxu0 0.0
    %458 = vmatpush1.msra.mxu0 0.0
    %459 = vmatprep.subr.mxu0 0.0
    %460 = vmatpush1.msra.mxu0 0.0
    %461 = vmatprep.subr.mxu0 0.0
    %462 = vmatpush1.msra.mxu0 0.0
    %463 = vmatprep.subr.mxu0 0.0
    %464 = vmatpush1.msra.mxu0 0.0
    %465 = vmatprep.subr.mxu0 0.0
    %466 = vmatpush1.msra.mxu0 0.0
    %467 = vmatprep.subr.mxu0 0.0
    %468 = vmatpush1.msra.mxu0 0.0
    %469 = vmatprep.subr.mxu0 0.0
    %470 = vmatpush1.msra.mxu0 0.0
    %471 = vmatprep.subr.mxu0 0.0
    %472 = vmatpush1.msra.mxu0 0.0
    %473 = vmatprep.subr.mxu0 0.0
    %474 = vmatpush1.msra.mxu0 0.0
    %475 = vmatprep.subr.mxu0 0.0
    %476 = vmatpush1.msra.mxu0 0.0
    %477 = vmatprep.subr.mxu0 0.0
    %478 = vmatpush1.msra.mxu0 0.0
    %479 = vmatprep.subr.mxu0 0.0
    %480 = vmatpush1.msra.mxu0 0.0
    %481 = vmatprep.subr.mxu0 0.0
    %482 = vmatpush1.msra.mxu0 0.0
    %483 = vmatprep.subr.mxu0 0.0
    %484 = vmatpush1.msra.mxu0 0.0
    %485 = vmatprep.subr.mxu0 0.0
    %486 = vmatpush1.msra.mxu0 0.0
    %487 = vmatprep.subr.mxu0 0.0
    %488 = vmatpush1.msra.mxu0 0.0
    %489 = vmatprep.subr.mxu0 0.0
    %490 = vmatpush1.msra.mxu0 0.0
    %491 = vmatprep.subr.mxu0 0.0
    %492 = vmatpush1.msra.mxu0 0.0
    %493 = vmatprep.subr.mxu0 0.0
    %494 = vmatpush1.msra.mxu0 0.0
    %495 = vmatprep.subr.mxu0 0.0
    %496 = vmatpush1.msra.mxu0 0.0
    %497 = vmatprep.subr.mxu0 0.0
    %498 = vmatpush1.msra.mxu0 0.0
    %499 = vmatprep.subr.mxu0 0.0
    %500 = vmatpush1.msra.mxu0 0.0
    %501 = vmatprep.subr.mxu0 0.0
    %502 = vmatpush1.msra.mxu0 0.0
    %503 = vmatprep.subr.mxu0 0.0
    %504 = vmatpush1.msra.mxu0 0.0
    %505 = vmatprep.subr.mxu0 0.0
    %506 = vmatpush1.msra.mxu0 0.0
    %507 = vmatprep.mubr.f32.mxu0 0.0
    %508 = vmatmul.mubr.f32.gmra.mrb[0].mxu0 %v438
    %v509 = vpop.f32.mrb[0].mxu0
    %v510 = vadd.f32 %v435, %v509
    %v511 = vpop.f32.mrb[0].mxu0
    %512 = vmatprep.mubr.f32.mxu0 0.0
    %513 = vmatmul.mubr.f32.gmra.mrb[0].mxu0 %v441
    %v514 = vpop.f32.mrb[0].mxu0
    %v515 = vadd.f32 %v435, %v514
    %v516 = vpop.f32.mrb[0].mxu0
    %517 = vdwg.mxu0
    %v518 = vmax.f32 %v510, 0.0
    %v519 = vmax.f32 %v515, 0.0
    %v521 = vlaneseq
    %v522 = vshrl.u32 %v521, 7
    %v523 = vsub.s32 0, %v522
    %v524 = vrot.slane %v421, %v523
    %v527 = vsel %vm328, %v518, 0
    %v530 = vsel %vm328, %v519, 0
    %532 = vmatprep.subr.mxu0 0.0
    %533 = vmatpush1.msra.mxu0 %v417
    %534 = vmatprep.subr.mxu0 0.0
    %535 = vmatpush1.msra.mxu0 %v418
    %536 = vmatprep.subr.mxu0 0.0
    %537 = vmatpush1.msra.mxu0 %v419
    %538 = vmatprep.subr.mxu0 0.0
    %539 = vmatpush1.msra.mxu0 %v420
    %540 = vmatprep.subr.mxu0 0.0
    %541 = vmatpush1.msra.mxu0 0.0
    %542 = vmatprep.subr.mxu0 0.0
    %543 = vmatpush1.msra.mxu0 0.0
    %544 = vmatprep.subr.mxu0 0.0
    %545 = vmatpush1.msra.mxu0 0.0
    %546 = vmatprep.subr.mxu0 0.0
    %547 = vmatpush1.msra.mxu0 0.0
    %548 = vmatprep.subr.mxu0 0.0
    %549 = vmatpush1.msra.mxu0 0.0
    %550 = vmatprep.subr.mxu0 0.0
    %551 = vmatpush1.msra.mxu0 0.0
    %552 = vmatprep.subr.mxu0 0.0
    %553 = vmatpush1.msra.mxu0 0.0
    %554 = vmatprep.subr.mxu0 0.0
    %555 = vmatpush1.msra.mxu0 0.0
    %556 = vmatprep.subr.mxu0 0.0
    %557 = vmatpush1.msra.mxu0 0.0
    %558 = vmatprep.subr.mxu0 0.0
    %559 = vmatpush1.msra.mxu0 0.0
    %560 = vmatprep.subr.mxu0 0.0
    %561 = vmatpush1.msra.mxu0 0.0
    %562 = vmatprep.subr.mxu0 0.0
    %563 = vmatpush1.msra.mxu0 0.0
    %564 = vmatprep.subr.mxu0 0.0
    %565 = vmatpush1.msra.mxu0 0.0
    %566 = vmatprep.subr.mxu0 0.0
    %567 = vmatpush1.msra.mxu0 0.0
    %568 = vmatprep.subr.mxu0 0.0
    %569 = vmatpush1.msra.mxu0 0.0
    %570 = vmatprep.subr.mxu0 0.0
    %571 = vmatpush1.msra.mxu0 0.0
    %572 = vmatprep.subr.mxu0 0.0
    %573 = vmatpush1.msra.mxu0 0.0
    %574 = vmatprep.subr.mxu0 0.0
    %575 = vmatpush1.msra.mxu0 0.0
    %576 = vmatprep.subr.mxu0 0.0
    %577 = vmatpush1.msra.mxu0 0.0
    %578 = vmatprep.subr.mxu0 0.0
    %579 = vmatpush1.msra.mxu0 0.0
    %580 = vmatprep.subr.mxu0 0.0
    %581 = vmatpush1.msra.mxu0 0.0
    %582 = vmatprep.subr.mxu0 0.0
    %583 = vmatpush1.msra.mxu0 0.0
    %584 = vmatprep.subr.mxu0 0.0
    %585 = vmatpush1.msra.mxu0 0.0
    %586 = vmatprep.subr.mxu0 0.0
    %587 = vmatpush1.msra.mxu0 0.0
    %588 = vmatprep.subr.mxu0 0.0
    %589 = vmatpush1.msra.mxu0 0.0
    %590 = vmatprep.subr.mxu0 0.0
    %591 = vmatpush1.msra.mxu0 0.0
    %592 = vmatprep.subr.mxu0 0.0
    %593 = vmatpush1.msra.mxu0 0.0
    %594 = vmatprep.subr.mxu0 0.0
    %595 = vmatpush1.msra.mxu0 0.0
    %596 = vmatprep.mubr.f32.mxu0 0.0
    %597 = vmatmul.mubr.f32.gmra.mrb[0].mxu0 %v527
    %v598 = vpop.f32.mrb[0].mxu0
    %v599 = vadd.f32 %v524, %v598
    %v600 = vpop.f32.mrb[0].mxu0
    %601 = vmatprep.mubr.f32.mxu0 0.0
    %602 = vmatmul.mubr.f32.gmra.mrb[0].mxu0 %v530
    %v603 = vpop.f32.mrb[0].mxu0
    %v604 = vadd.f32 %v524, %v603
    %v605 = vpop.f32.mrb[0].mxu0
    %606 = vdwg.mxu0
    %v607 = vmax.f32 %v599, 0.0
    %v608 = vmax.f32 %v604, 0.0
    %v610 = vlaneseq
    %v611 = vshrl.u32 %v610, 7
    %v612 = vsub.s32 0, %v611
    %v613 = vrot.slane %v430, %v612
    %v616 = vsel %vm238, %v607, 0
    %v619 = vsel %vm238, %v608, 0
    %621 = vmatprep.subr.mxu0 0.0
    %622 = vmatpush1.msra.mxu0 %v422
    %623 = vmatprep.subr.mxu0 0.0
    %624 = vmatpush1.msra.mxu0 %v423
    %625 = vmatprep.subr.mxu0 0.0
    %626 = vmatpush1.msra.mxu0 %v424
    %627 = vmatprep.subr.mxu0 0.0
    %628 = vmatpush1.msra.mxu0 %v425
    %629 = vmatprep.subr.mxu0 0.0
    %630 = vmatpush1.msra.mxu0 %v426
    %631 = vmatprep.subr.mxu0 0.0
    %632 = vmatpush1.msra.mxu0 %v427
    %633 = vmatprep.subr.mxu0 0.0
    %634 = vmatpush1.msra.mxu0 %v428
    %635 = vmatprep.subr.mxu0 0.0
    %636 = vmatpush1.msra.mxu0 %v429
    %637 = vmatprep.subr.mxu0 0.0
    %638 = vmatpush1.msra.mxu0 0.0
    %639 = vmatprep.subr.mxu0 0.0
    %640 = vmatpush1.msra.mxu0 0.0
    %641 = vmatprep.subr.mxu0 0.0
    %642 = vmatpush1.msra.mxu0 0.0
    %643 = vmatprep.subr.mxu0 0.0
    %644 = vmatpush1.msra.mxu0 0.0
    %645 = vmatprep.subr.mxu0 0.0
    %646 = vmatpush1.msra.mxu0 0.0
    %647 = vmatprep.subr.mxu0 0.0
    %648 = vmatpush1.msra.mxu0 0.0
    %649 = vmatprep.subr.mxu0 0.0
    %650 = vmatpush1.msra.mxu0 0.0
    %651 = vmatprep.subr.mxu0 0.0
    %652 = vmatpush1.msra.mxu0 0.0
    %653 = vmatprep.subr.mxu0 0.0
    %654 = vmatpush1.msra.mxu0 0.0
    %655 = vmatprep.subr.mxu0 0.0
    %656 = vmatpush1.msra.mxu0 0.0
    %657 = vmatprep.subr.mxu0 0.0
    %658 = vmatpush1.msra.mxu0 0.0
    %659 = vmatprep.subr.mxu0 0.0
    %660 = vmatpush1.msra.mxu0 0.0
    %661 = vmatprep.subr.mxu0 0.0
    %662 = vmatpush1.msra.mxu0 0.0
    %663 = vmatprep.subr.mxu0 0.0
    %664 = vmatpush1.msra.mxu0 0.0
    %665 = vmatprep.subr.mxu0 0.0
    %666 = vmatpush1.msra.mxu0 0.0
    %667 = vmatprep.subr.mxu0 0.0
    %668 = vmatpush1.msra.mxu0 0.0
    %669 = vmatprep.subr.mxu0 0.0
    %670 = vmatpush1.msra.mxu0 0.0
    %671 = vmatprep.subr.mxu0 0.0
    %672 = vmatpush1.msra.mxu0 0.0
    %673 = vmatprep.subr.mxu0 0.0
    %674 = vmatpush1.msra.mxu0 0.0
    %675 = vmatprep.subr.mxu0 0.0
    %676 = vmatpush1.msra.mxu0 0.0
    %677 = vmatprep.subr.mxu0 0.0
    %678 = vmatpush1.msra.mxu0 0.0
    %679 = vmatprep.subr.mxu0 0.0
    %680 = vmatpush1.msra.mxu0 0.0
    %681 = vmatprep.subr.mxu0 0.0
    %682 = vmatpush1.msra.mxu0 0.0
    %683 = vmatprep.subr.mxu0 0.0
    %684 = vmatpush1.msra.mxu0 0.0
    %685 = vmatprep.mubr.f32.mxu0 0.0
    %686 = vmatmul.mubr.f32.gmra.mrb[0].mxu0 %v616
    %v687 = vpop.f32.mrb[0].mxu0
    %v688 = vadd.f32 %v613, %v687
    %v689 = vpop.f32.mrb[0].mxu0
    %690 = vmatprep.mubr.f32.mxu0 0.0
    %691 = vmatmul.mubr.f32.gmra.mrb[0].mxu0 %v619
    %v692 = vpop.f32.mrb[0].mxu0
    %v693 = vadd.f32 %v613, %v692
    %v694 = vpop.f32.mrb[0].mxu0
    %695 = vdwg.mxu0
    %v696 = vxor.u32 %v688, 2147483648
    %v697 = vxor.u32 %v693, 2147483648
    %v698 = vmul.f32 %v696, 1.442695
    %v699 = vpow.pop %v698
    %v700 = vmul.f32 %v697, 1.442695
    %v701 = vpow.pop %v700
    %v702 = vadd.f32 %v699, 1.0
    %v703 = vadd.f32 %v701, 1.0
    %v704 = vrcp.pop %v702
    %v705 = vmul.f32 1.0, %v704
    %v706 = vrcp.pop %v703
    %v707 = vmul.f32 1.0, %v706
    %v708 = vld [vmem:[%s13] sm:$0xff]
    %v709 = vld [vmem:[%s13 + $0x8] sm:$0xff]
    %v710 = vld [vmem:[%s13 + $0x10] sm:$0xff]
    %v711 = vld [vmem:[%s13 + $0x18] sm:$0xff]
    %v712 = vld [vmem:[%s14] sm:$0x1]
    %v713 = vld [vmem:[#allocation8] sm:$0xff]
    %v714 = vld [vmem:[#allocation8 + $0x8] sm:$0xff]
    %v715 = vld [vmem:[#allocation8 + $0x10] sm:$0xff]
    %v716 = vld [vmem:[#allocation8 + $0x18] sm:$0xff]
    %v717 = vld [vmem:[%s16] sm:$0x1]
    %v718 = vld [vmem:[%s17] sm:$0xff]
    %v719 = vld [vmem:[%s17 + $0x8] sm:$0xff]
    %v720 = vld [vmem:[%s17 + $0x10] sm:$0xff]
    %v721 = vld [vmem:[%s17 + $0x18] sm:$0xff]
    %v722 = vld [vmem:[%s17 + $0x20] sm:$0xff]
    %v723 = vld [vmem:[%s17 + $0x28] sm:$0xff]
    %v724 = vld [vmem:[%s17 + $0x30] sm:$0xff]
    %v725 = vld [vmem:[%s17 + $0x38] sm:$0xff]
    %v726 = vld [vmem:[%s18] sm:$0x1]
    %v728 = vlaneseq
    %v729 = vshrl.u32 %v728, 7
    %v730 = vsub.s32 0, %v729
    %v731 = vrot.slane %v712, %v730
    %733 = vmatprep.subr.mxu0 0.0
    %734 = vmatpush1.msra.mxu0 %v708
    %735 = vmatprep.subr.mxu0 0.0
    %736 = vmatpush1.msra.mxu0 %v709
    %737 = vmatprep.subr.mxu0 0.0
    %738 = vmatpush1.msra.mxu0 %v710
    %739 = vmatprep.subr.mxu0 0.0
    %740 = vmatpush1.msra.mxu0 %v711
    %741 = vmatprep.subr.mxu0 0.0
    %742 = vmatpush1.msra.mxu0 0.0
    %743 = vmatprep.subr.mxu0 0.0
    %744 = vmatpush1.msra.mxu0 0.0
    %745 = vmatprep.subr.mxu0 0.0
    %746 = vmatpush1.msra.mxu0 0.0
    %747 = vmatprep.subr.mxu0 0.0
    %748 = vmatpush1.msra.mxu0 0.0
    %749 = vmatprep.subr.mxu0 0.0
    %750 = vmatpush1.msra.mxu0 0.0
    %751 = vmatprep.subr.mxu0 0.0
    %752 = vmatpush1.msra.mxu0 0.0
    %753 = vmatprep.subr.mxu0 0.0
    %754 = vmatpush1.msra.mxu0 0.0
    %755 = vmatprep.subr.mxu0 0.0
    %756 = vmatpush1.msra.mxu0 0.0
    %757 = vmatprep.subr.mxu0 0.0
    %758 = vmatpush1.msra.mxu0 0.0
    %759 = vmatprep.subr.mxu0 0.0
    %760 = vmatpush1.msra.mxu0 0.0
    %761 = vmatprep.subr.mxu0 0.0
    %762 = vmatpush1.msra.mxu0 0.0
    %763 = vmatprep.subr.mxu0 0.0
    %764 = vmatpush1.msra.mxu0 0.0
    %765 = vmatprep.subr.mxu0 0.0
    %766 = vmatpush1.msra.mxu0 0.0
    %767 = vmatprep.subr.mxu0 0.0
    %768 = vmatpush1.msra.mxu0 0.0
    %769 = vmatprep.subr.mxu0 0.0
    %770 = vmatpush1.msra.mxu0 0.0
    %771 = vmatprep.subr.mxu0 0.0
    %772 = vmatpush1.msra.mxu0 0.0
    %773 = vmatprep.subr.mxu0 0.0
    %774 = vmatpush1.msra.mxu0 0.0
    %775 = vmatprep.subr.mxu0 0.0
    %776 = vmatpush1.msra.mxu0 0.0
    %777 = vmatprep.subr.mxu0 0.0
    %778 = vmatpush1.msra.mxu0 0.0
    %779 = vmatprep.subr.mxu0 0.0
    %780 = vmatpush1.msra.mxu0 0.0
    %781 = vmatprep.subr.mxu0 0.0
    %782 = vmatpush1.msra.mxu0 0.0
    %783 = vmatprep.subr.mxu0 0.0
    %784 = vmatpush1.msra.mxu0 0.0
    %785 = vmatprep.subr.mxu0 0.0
    %786 = vmatpush1.msra.mxu0 0.0
    %787 = vmatprep.subr.mxu0 0.0
    %788 = vmatpush1.msra.mxu0 0.0
    %789 = vmatprep.subr.mxu0 0.0
    %790 = vmatpush1.msra.mxu0 0.0
    %791 = vmatprep.subr.mxu0 0.0
    %792 = vmatpush1.msra.mxu0 0.0
    %793 = vmatprep.subr.mxu0 0.0
    %794 = vmatpush1.msra.mxu0 0.0
    %795 = vmatprep.subr.mxu0 0.0
    %796 = vmatpush1.msra.mxu0 0.0
    %797 = vmatprep.mubr.f32.mxu0 0.0
    %798 = vmatmul.mubr.f32.gmra.mrb[0].mxu0 %v438
    %v799 = vpop.f32.mrb[0].mxu0
    %v800 = vadd.f32 %v731, %v799
    %v801 = vpop.f32.mrb[0].mxu0
    %802 = vmatprep.mubr.f32.mxu0 0.0
    %803 = vmatmul.mubr.f32.gmra.mrb[0].mxu0 %v441
    %v804 = vpop.f32.mrb[0].mxu0
    %v805 = vadd.f32 %v731, %v804
    %v806 = vpop.f32.mrb[0].mxu0
    %807 = vdwg.mxu0
    %v808 = vmax.f32 %v800, 0.0
    %v809 = vmax.f32 %v805, 0.0
    %v811 = vlaneseq
    %v812 = vshrl.u32 %v811, 7
    %v813 = vsub.s32 0, %v812
    %v814 = vrot.slane %v717, %v813
    %v817 = vsel %vm328, %v808, 0
    %v820 = vsel %vm328, %v809, 0
    %822 = vmatprep.subr.mxu0 0.0
    %823 = vmatpush1.msra.mxu0 %v713
    %824 = vmatprep.subr.mxu0 0.0
    %825 = vmatpush1.msra.mxu0 %v714
    %826 = vmatprep.subr.mxu0 0.0
    %827 = vmatpush1.msra.mxu0 %v715
    %828 = vmatprep.subr.mxu0 0.0
    %829 = vmatpush1.msra.mxu0 %v716
    %830 = vmatprep.subr.mxu0 0.0
    %831 = vmatpush1.msra.mxu0 0.0
    %832 = vmatprep.subr.mxu0 0.0
    %833 = vmatpush1.msra.mxu0 0.0
    %834 = vmatprep.subr.mxu0 0.0
    %835 = vmatpush1.msra.mxu0 0.0
    %836 = vmatprep.subr.mxu0 0.0
    %837 = vmatpush1.msra.mxu0 0.0
    %838 = vmatprep.subr.mxu0 0.0
    %839 = vmatpush1.msra.mxu0 0.0
    %840 = vmatprep.subr.mxu0 0.0
    %841 = vmatpush1.msra.mxu0 0.0
    %842 = vmatprep.subr.mxu0 0.0
    %843 = vmatpush1.msra.mxu0 0.0
    %844 = vmatprep.subr.mxu0 0.0
    %845 = vmatpush1.msra.mxu0 0.0
    %846 = vmatprep.subr.mxu0 0.0
    %847 = vmatpush1.msra.mxu0 0.0
    %848 = vmatprep.subr.mxu0 0.0
    %849 = vmatpush1.msra.mxu0 0.0
    %850 = vmatprep.subr.mxu0 0.0
    %851 = vmatpush1.msra.mxu0 0.0
    %852 = vmatprep.subr.mxu0 0.0
    %853 = vmatpush1.msra.mxu0 0.0
    %854 = vmatprep.subr.mxu0 0.0
    %855 = vmatpush1.msra.mxu0 0.0
    %856 = vmatprep.subr.mxu0 0.0
    %857 = vmatpush1.msra.mxu0 0.0
    %858 = vmatprep.subr.mxu0 0.0
    %859 = vmatpush1.msra.mxu0 0.0
    %860 = vmatprep.subr.mxu0 0.0
    %861 = vmatpush1.msra.mxu0 0.0
    %862 = vmatprep.subr.mxu0 0.0
    %863 = vmatpush1.msra.mxu0 0.0
    %864 = vmatprep.subr.mxu0 0.0
    %865 = vmatpush1.msra.mxu0 0.0
    %866 = vmatprep.subr.mxu0 0.0
    %867 = vmatpush1.msra.mxu0 0.0
    %868 = vmatprep.subr.mxu0 0.0
    %869 = vmatpush1.msra.mxu0 0.0
    %870 = vmatprep.subr.mxu0 0.0
    %871 = vmatpush1.msra.mxu0 0.0
    %872 = vmatprep.subr.mxu0 0.0
    %873 = vmatpush1.msra.mxu0 0.0
    %874 = vmatprep.subr.mxu0 0.0
    %875 = vmatpush1.msra.mxu0 0.0
    %876 = vmatprep.subr.mxu0 0.0
    %877 = vmatpush1.msra.mxu0 0.0
    %878 = vmatprep.subr.mxu0 0.0
    %879 = vmatpush1.msra.mxu0 0.0
    %880 = vmatprep.subr.mxu0 0.0
    %881 = vmatpush1.msra.mxu0 0.0
    %882 = vmatprep.subr.mxu0 0.0
    %883 = vmatpush1.msra.mxu0 0.0
    %884 = vmatprep.subr.mxu0 0.0
    %885 = vmatpush1.msra.mxu0 0.0
    %886 = vmatprep.mubr.f32.mxu0 0.0
    %887 = vmatmul.mubr.f32.gmra.mrb[0].mxu0 %v817
    %v888 = vpop.f32.mrb[0].mxu0
    %v889 = vadd.f32 %v814, %v888
    %v890 = vpop.f32.mrb[0].mxu0
    %891 = vmatprep.mubr.f32.mxu0 0.0
    %892 = vmatmul.mubr.f32.gmra.mrb[0].mxu0 %v820
    %v893 = vpop.f32.mrb[0].mxu0
    %v894 = vadd.f32 %v814, %v893
    %v895 = vpop.f32.mrb[0].mxu0
    %896 = vdwg.mxu0
    %v897 = vmax.f32 %v889, 0.0
    %v898 = vmax.f32 %v894, 0.0
    %v900 = vlaneseq
    %v901 = vshrl.u32 %v900, 7
    %v902 = vsub.s32 0, %v901
    %v903 = vrot.slane %v726, %v902
    %v906 = vsel %vm238, %v897, 0
    %v909 = vsel %vm238, %v898, 0
    %911 = vmatprep.subr.mxu0 0.0
    %912 = vmatpush1.msra.mxu0 %v718
    %913 = vmatprep.subr.mxu0 0.0
    %914 = vmatpush1.msra.mxu0 %v719
    %915 = vmatprep.subr.mxu0 0.0
    %916 = vmatpush1.msra.mxu0 %v720
    %917 = vmatprep.subr.mxu0 0.0
    %918 = vmatpush1.msra.mxu0 %v721
    %919 = vmatprep.subr.mxu0 0.0
    %920 = vmatpush1.msra.mxu0 %v722
    %921 = vmatprep.subr.mxu0 0.0
    %922 = vmatpush1.msra.mxu0 %v723
    %923 = vmatprep.subr.mxu0 0.0
    %924 = vmatpush1.msra.mxu0 %v724
    %925 = vmatprep.subr.mxu0 0.0
    %926 = vmatpush1.msra.mxu0 %v725
    %927 = vmatprep.subr.mxu0 0.0
    %928 = vmatpush1.msra.mxu0 0.0
    %929 = vmatprep.subr.mxu0 0.0
    %930 = vmatpush1.msra.mxu0 0.0
    %931 = vmatprep.subr.mxu0 0.0
    %932 = vmatpush1.msra.mxu0 0.0
    %933 = vmatprep.subr.mxu0 0.0
    %934 = vmatpush1.msra.mxu0 0.0
    %935 = vmatprep.subr.mxu0 0.0
    %936 = vmatpush1.msra.mxu0 0.0
    %937 = vmatprep.subr.mxu0 0.0
    %938 = vmatpush1.msra.mxu0 0.0
    %939 = vmatprep.subr.mxu0 0.0
    %940 = vmatpush1.msra.mxu0 0.0
    %941 = vmatprep.subr.mxu0 0.0
    %942 = vmatpush1.msra.mxu0 0.0
    %943 = vmatprep.subr.mxu0 0.0
    %944 = vmatpush1.msra.mxu0 0.0
    %945 = vmatprep.subr.mxu0 0.0
    %946 = vmatpush1.msra.mxu0 0.0
    %947 = vmatprep.subr.mxu0 0.0
    %948 = vmatpush1.msra.mxu0 0.0
    %949 = vmatprep.subr.mxu0 0.0
    %950 = vmatpush1.msra.mxu0 0.0
    %951 = vmatprep.subr.mxu0 0.0
    %952 = vmatpush1.msra.mxu0 0.0
    %953 = vmatprep.subr.mxu0 0.0
    %954 = vmatpush1.msra.mxu0 0.0
    %955 = vmatprep.subr.mxu0 0.0
    %956 = vmatpush1.msra.mxu0 0.0
    %957 = vmatprep.subr.mxu0 0.0
    %958 = vmatpush1.msra.mxu0 0.0
    %959 = vmatprep.subr.mxu0 0.0
    %960 = vmatpush1.msra.mxu0 0.0
    %961 = vmatprep.subr.mxu0 0.0
    %962 = vmatpush1.msra.mxu0 0.0
    %963 = vmatprep.subr.mxu0 0.0
    %964 = vmatpush1.msra.mxu0 0.0
    %965 = vmatprep.subr.mxu0 0.0
    %966 = vmatpush1.msra.mxu0 0.0
    %967 = vmatprep.subr.mxu0 0.0
    %968 = vmatpush1.msra.mxu0 0.0
    %969 = vmatprep.subr.mxu0 0.0
    %970 = vmatpush1.msra.mxu0 0.0
    %971 = vmatprep.subr.mxu0 0.0
    %972 = vmatpush1.msra.mxu0 0.0
    %973 = vmatprep.subr.mxu0 0.0
    %974 = vmatpush1.msra.mxu0 0.0
    %975 = vmatprep.mubr.f32.mxu0 0.0
    %976 = vmatmul.mubr.f32.gmra.mrb[0].mxu0 %v906
    %v977 = vpop.f32.mrb[0].mxu0
    %v978 = vadd.f32 %v903, %v977
    %v979 = vpop.f32.mrb[0].mxu0
    %980 = vmatprep.mubr.f32.mxu0 0.0
    %981 = vmatmul.mubr.f32.gmra.mrb[0].mxu0 %v909
    %v982 = vpop.f32.mrb[0].mxu0
    %v983 = vadd.f32 %v903, %v982
    %v984 = vpop.f32.mrb[0].mxu0
    %985 = vdwg.mxu0
    %v986 = vxor.u32 %v978, 2147483648
    %v987 = vxor.u32 %v983, 2147483648
    %v988 = vmul.f32 %v986, 1.442695
    %v989 = vpow.pop %v988
    %v990 = vmul.f32 %v987, 1.442695
    %v991 = vpow.pop %v990
    %v992 = vadd.f32 %v989, 1.0
    %v993 = vadd.f32 %v991, 1.0
    %v994 = vrcp.pop %v992
    %v995 = vmul.f32 1.0, %v994
    %v996 = vrcp.pop %v993
    %v997 = vmul.f32 1.0, %v996
    %998 = vst.msk [vmem:[#allocation10] sm:$0xff] %vm328, %v410
    %999 = vst.msk [vmem:[#allocation10 + $0x8] sm:$0xff] %vm328, %v411
    %v1000 = vsub.f32 %v116, %v705
    %v1001 = vsub.f32 %v117, %v707
    %v1002 = vsub.f32 %v116, %v995
    %v1003 = vsub.f32 %v117, %v997
    %v1004 = vmul.f32 %v1000, %v1000
    %v1005 = vmul.f32 %v1001, %v1001
    %1006 = vadd.xlane.f32.xlu0 %v1004
    %v1007 = vpop.xlane.xlu0 %1006
    %1008 = vadd.xlane.f32.xlu0 %v1005
    %v1009 = vpop.xlane.xlu0 %1008
    %v1010 = vmul.f32 %v1002, %v1002
    %v1011 = vmul.f32 %v1003, %v1003
    %1012 = vadd.xlane.f32.xlu0 %v1010
    %v1013 = vpop.xlane.xlu0 %1012
    %1014 = vadd.xlane.f32.xlu0 %v1011
    %v1015 = vpop.xlane.xlu0 %1014
    %v1016 = vmul.f32 %v1007, 0.00390625
    %v1017 = vmul.f32 %v1009, 0.00390625
    %v1018 = vmul.f32 %v1013, 0.00390625
    %v1019 = vmul.f32 %v1015, 0.00390625
    %v1020 = vadd.f32 %v1016, %v1018
    %v1021 = vadd.f32 %v1017, %v1019
    %vm1022 = vcmask 7168
    %1023 = vst.msk [vmem:[%s20] sm:$0xff] %vm1022, %v1020
    %1024 = vst.msk [vmem:[%s20 + $0x8] sm:$0xff] %vm1022, %v1021
    // Predicated region
    $region94: #{usad_forward.1} parent=1 // pred_check
      _
    $region95: #{usad_forward.1} parent=1 // pred_check_branch
      %1026 = sbr.rel (0) target = $region97
    $region96: #{usad_forward.1} parent=1 // pred_region
      %s1028 = ssub.s32 256, 256
      %1029 = vsyncadd [#allocation4], %s1028
      %s1030 = sshll.u32 [#allocation10], 4
      %s1031 = int_to_ptr.vmem [resolvable:$true] %s1030
      %1036 = dma.vmem_to_hbm [thread:$0]  %s1031, 256, %s19, [#allocation4], 128, 128, 8
    $region97: #{usad_forward.1} parent=1 // pred_fallthru
      _
    // Predicated region
    $region98: #{usad_forward.1} parent=1 // pred_check
      _
    $region99: #{usad_forward.1} parent=1 // pred_check_branch
      %1038 = sbr.rel (0) target = $region101
    $region100: #{usad_forward.1} parent=1 // pred_region
      _
    $region101: #{usad_forward.1} parent=1 // pred_fallthru
      _
    // Predicated region
    $region102: #{usad_forward.1} parent=1 // pred_check
      _
    $region103: #{usad_forward.1} parent=1 // pred_check_branch
      %1040 = sbr.rel (0) target = $region105
    $region104: #{usad_forward.1} parent=1 // pred_region
      %1041 = dma.done [#allocation4], 256
    $region105: #{usad_forward.1} parent=1 // pred_fallthru
      _
    // Predicated region
    $region106: #{usad_forward.1} parent=1 // pred_check
      _
    $region107: #{usad_forward.1} parent=1 // pred_check_branch
      %1043 = sbr.rel (0) target = $region109
    $region108: #{usad_forward.1} parent=1 // pred_region
      _
    $region109: #{usad_forward.1} parent=1 // pred_fallthru
      _
    %1044 = vsyncpa [#allocation3], 1
    %1045 = vsyncpa [#allocation6], 1
    %1046 = vsyncpa [#allocation9], 1
    %1047 = vsyncpa [#allocation4], 1

</llo_original>
